<compile_context>
chip_gen: v7x
topology: tpu7x:2x2x1
jax: 0.10.0
libtpu: 0.0.40
codegen_flags: <defaults>
</compile_context>

<pallas_src>
import jax
import jax.numpy as jnp
import numpy as np
from jax.experimental import pallas as pl
from jax.experimental.pallas import tpu as pltpu


def _spp_kernel(x_ref, o_ref, pad_ref):
    # x_ref  : (Cb, H, W)          NCHW channel slab (N squeezed away)
    # o_ref  : (4, Cb, H, W)       [pool13, pool9, pool5, identity]
    # pad_ref: (Cb, H+4, W+4)      scratch with a 2-wide -inf halo
    Cb, H, W = x_ref.shape
    dt = x_ref.dtype

    # -inf halo strips only (the interior is overwritten by every stage).
    # Scratch is per-core, so this stays per-grid-step (no pid==0 hoisting).
    pad_ref[:, 0:2, :] = jnp.full((Cb, 2, W + 4), -jnp.inf, dt)
    pad_ref[:, H + 2:H + 4, :] = jnp.full((Cb, 2, W + 4), -jnp.inf, dt)
    pad_ref[:, :, 0:2] = jnp.full((Cb, H + 4, 2), -jnp.inf, dt)
    pad_ref[:, :, W + 2:W + 4] = jnp.full((Cb, H + 4, 2), -jnp.inf, dt)

    def pool5_same(v):
        """5x5, stride-1, pad-2 (-inf) max pool of a (Cb, H, W) value."""
        pad_ref[:, 2:H + 2, 2:W + 2] = v
        # Row (H / sublane) pass: five row-shifted ref windows, balanced max
        # tree.  The result keeps the -inf W halo columns for the column pass.
        r = jnp.maximum(
            jnp.maximum(pad_ref[:, 0:H, :], pad_ref[:, 1:H + 1, :]),
            jnp.maximum(pad_ref[:, 2:H + 2, :], pad_ref[:, 3:H + 3, :]),
        )
        r = jnp.maximum(r, pad_ref[:, 4:H + 4, :])
        # Column (W / lane) pass: in-register lane slices of the row result
        # (kept as value slices; they ride the XLU shift path, no VMEM pass).
        c = jnp.maximum(
            jnp.maximum(r[:, :, 0:W], r[:, :, 1:W + 1]),
            jnp.maximum(r[:, :, 2:W + 2], r[:, :, 3:W + 3]),
        )
        return jnp.maximum(c, r[:, :, 4:W + 4])

    x = x_ref[...]
    o_ref[3] = x                    # identity branch
    p5 = pool5_same(x)              # MaxPool2d(5, 1, 2)
    o_ref[2] = p5
    p9 = pool5_same(p5)             # P5∘P5      == MaxPool2d(9, 1, 4)
    o_ref[1] = p9
    p13 = pool5_same(p9)            # P5∘P5∘P5   == MaxPool2d(13, 1, 6)
    o_ref[0] = p13


def _choose_cb(C, H, W, itemsize, budget_bytes, min_blocks):
    """Largest divisor of C whose per-step VMEM working set fits the budget."""
    hw = H * W
    pad = (H + 4) * (W + 4)
    # double-buffered input + double-buffered 4-plane output + scratch
    # + ~6 live full-size value temporaries inside the kernel.
    per_c = itemsize * (2 * hw + 2 * 4 * hw + pad + 6 * hw)
    best = 1
    for d in range(1, C + 1):
        if C % d != 0 or (C // d) < min_blocks:
            continue
        if d * per_c <= budget_bytes:
            best = d
    return best


def spatial_pyramid_pooling(x):
    """x: (N, C, H, W) float -> (N, 4*C, H, W), channel order [p13 | p9 | p5 | x]."""
    N, C, H, W = x.shape
    itemsize = jnp.dtype(x.dtype).itemsize

    # Generation-aware VMEM budget (v5e/v6e: 128 MiB physical, v7x: 64 MiB/core).
    try:
        vmem_cap = int(getattr(pltpu.get_tpu_info(), "vmem_capacity_bytes",
                               64 * 1024 * 1024))
    except Exception:
        vmem_cap = 64 * 1024 * 1024
    vmem_limit = max(16 * 1024 * 1024, min(vmem_cap // 2, 64 * 1024 * 1024))
    budget = (vmem_limit * 3) // 4

    # Megacore load balance: with a single batch keep the grid at >= 2 steps.
    min_blocks = 1 if N >= 2 else min(2, C)
    Cb = _choose_cb(C, H, W, itemsize, budget, min_blocks)

    grid_spec = pltpu.PrefetchScalarGridSpec(
        num_scalar_prefetch=0,
        grid=(N, C // Cb),
        in_specs=[
            pl.BlockSpec((pl.Squeezed(), Cb, H, W), lambda n, c: (n, c, 0, 0)),
        ],
        out_specs=pl.BlockSpec((pl.Squeezed(), 4, Cb, H, W),
                               lambda n, c: (n, 0, c, 0, 0)),
        scratch_shapes=[pltpu.VMEM((Cb, H + 4, W + 4), x.dtype)],
    )

    elems = N * C * H * W
    cost = pl.CostEstimate(
        flops=24 * elems,                       # ~24 max ops / element
        transcendentals=0,
        bytes_accessed=5 * elems * itemsize,    # read x once, write 4x
    )

    out5 = pl.pallas_call(
        _spp_kernel,
        out_shape=jax.ShapeDtypeStruct((N, 4, C, H, W), x.dtype),
        grid_spec=grid_spec,
        compiler_params=pltpu.CompilerParams(
            dimension_semantics=("parallel", "parallel"),
            vmem_limit_bytes=int(vmem_limit),
        ),
        cost_estimate=cost,
    )(x)

    # (N, 4, C, H, W) -> (N, 4C, H, W): contiguous reshape, no data movement.
    # Channel order [p13 | p9 | p5 | x] matches torch.cat(..., dim=1).
    return out5.reshape(N, 4 * C, H, W)


def _reference_spp(x):
    # Pure-JAX reference via reduce_window (correctness check only).
    def mp(k):
        p = k // 2
        return jax.lax.reduce_window(
            x, -jnp.inf, jax.lax.max,
            window_dimensions=(1, 1, k, k),
            window_strides=(1, 1, 1, 1),
            padding=((0, 0), (0, 0), (p, p), (p, p)),
        )
    return jnp.concatenate([mp(13), mp(9), mp(5), x], axis=1)


if __name__ == "__main__":
    key = jax.random.PRNGKey(0)
    x = jax.random.normal(key, (2, 4, 16, 16), dtype=jnp.float32)

    out = jax.block_until_ready(spatial_pyramid_pooling(x))
    ref = jax.block_until_ready(_reference_spp(x))

    assert out.shape == (2, 16, 16, 16), out.shape
    np.testing.assert_allclose(np.asarray(out), np.asarray(ref), atol=0, rtol=0)

    print("KERNEL_OK")
</pallas_src>

<mosaic_0001>
module attributes {stable_mosaic.version = 11 : i64} {
  func.func @_spp_kernel(%arg0: i32, %arg1: i32, %arg2: memref<1x4x16x16xf32, #tpu.memory_space<vmem>>, %arg3: memref<1x4x4x16x16xf32, #tpu.memory_space<vmem>>, %arg4: memref<4x20x20xf32, #tpu.memory_space<vmem>>) attributes {dimension_semantics = [#tpu.dimension_semantics<parallel>, #tpu.dimension_semantics<parallel>], iteration_bounds = array<i64: 2, 1>, scalar_prefetch = 0 : i64, scratch_operands = 1 : i64, tpu.core_type = #tpu.core_type<tc>, window_params = [{transform_indices = @transform_0, window_bounds = array<i64: 1, 4, 16, 16>}, {transform_indices = @transform_1, window_bounds = array<i64: 1, 4, 4, 16, 16>}]} {
    %cst = arith.constant 0xFF800000 : f32
    %0 = vector.broadcast %cst : f32 to vector<4x2x20xf32>
    %c0 = arith.constant 0 : index
    %c0_0 = arith.constant 0 : index
    %c0_1 = arith.constant 0 : index
    %1 = vector.load %arg4[%c0, %c0_0, %c0_1] : memref<4x20x20xf32, #tpu.memory_space<vmem>>, vector<4x2x20xf32>
    tpu.vector_store %arg4[%c0, %c0_0, %c0_1], %0 {strides = array<i32>} : memref<4x20x20xf32, #tpu.memory_space<vmem>>, vector<4x2x20xf32>,
    %cst_2 = arith.constant 0xFF800000 : f32
    %2 = vector.broadcast %cst_2 : f32 to vector<4x2x20xf32>
    %c0_3 = arith.constant 0 : index
    %c18 = arith.constant 18 : index
    %c0_4 = arith.constant 0 : index
    %3 = vector.load %arg4[%c0_3, %c18, %c0_4] : memref<4x20x20xf32, #tpu.memory_space<vmem>>, vector<4x2x20xf32>
    tpu.vector_store %arg4[%c0_3, %c18, %c0_4], %2 {strides = array<i32>} : memref<4x20x20xf32, #tpu.memory_space<vmem>>, vector<4x2x20xf32>,
    %cst_5 = arith.constant 0xFF800000 : f32
    %4 = vector.broadcast %cst_5 : f32 to vector<4x20x2xf32>
    %c0_6 = arith.constant 0 : index
    %c0_7 = arith.constant 0 : index
    %c0_8 = arith.constant 0 : index
    %5 = vector.load %arg4[%c0_6, %c0_7, %c0_8] : memref<4x20x20xf32, #tpu.memory_space<vmem>>, vector<4x20x2xf32>
    tpu.vector_store %arg4[%c0_6, %c0_7, %c0_8], %4 {strides = array<i32>} : memref<4x20x20xf32, #tpu.memory_space<vmem>>, vector<4x20x2xf32>,
    %cst_9 = arith.constant 0xFF800000 : f32
    %6 = vector.broadcast %cst_9 : f32 to vector<4x20x2xf32>
    %c0_10 = arith.constant 0 : index
    %c0_11 = arith.constant 0 : index
    %c18_12 = arith.constant 18 : index
    %7 = vector.load %arg4[%c0_10, %c0_11, %c18_12] : memref<4x20x20xf32, #tpu.memory_space<vmem>>, vector<4x20x2xf32>
    tpu.vector_store %arg4[%c0_10, %c0_11, %c18_12], %6 {strides = array<i32>} : memref<4x20x20xf32, #tpu.memory_space<vmem>>, vector<4x20x2xf32>,
    %c0_13 = arith.constant 0 : index
    %c0_14 = arith.constant 0 : index
    %c0_15 = arith.constant 0 : index
    %c0_16 = arith.constant 0 : index
    %8 = vector.load %arg2[%c0_13, %c0_14, %c0_15, %c0_16] : memref<1x4x16x16xf32, #tpu.memory_space<vmem>>, vector<1x4x16x16xf32>
    %9 = vector.shape_cast %8 : vector<1x4x16x16xf32> to vector<4x16x16xf32>
    %c0_17 = arith.constant 0 : index
    %c3 = arith.constant 3 : index
    %c0_18 = arith.constant 0 : index
    %c0_19 = arith.constant 0 : index
    %c0_20 = arith.constant 0 : index
    %10 = vector.load %arg3[%c0_17, %c3, %c0_18, %c0_19, %c0_20] : memref<1x4x4x16x16xf32, #tpu.memory_space<vmem>>, vector<1x1x4x16x16xf32>
    %11 = vector.shape_cast %10 : vector<1x1x4x16x16xf32> to vector<4x16x16xf32>
    %12 = vector.shape_cast %9 : vector<4x16x16xf32> to vector<1x1x4x16x16xf32>
    tpu.vector_store %arg3[%c0_17, %c3, %c0_18, %c0_19, %c0_20], %12 {strides = array<i32>} : memref<1x4x4x16x16xf32, #tpu.memory_space<vmem>>, vector<1x1x4x16x16xf32>,
    %c0_21 = arith.constant 0 : index
    %c2 = arith.constant 2 : index
    %c2_22 = arith.constant 2 : index
    %13 = vector.load %arg4[%c0_21, %c2, %c2_22] : memref<4x20x20xf32, #tpu.memory_space<vmem>>, vector<4x16x16xf32>
    tpu.vector_store %arg4[%c0_21, %c2, %c2_22], %9 {strides = array<i32>} : memref<4x20x20xf32, #tpu.memory_space<vmem>>, vector<4x16x16xf32>,
    %c0_23 = arith.constant 0 : index
    %c0_24 = arith.constant 0 : index
    %c0_25 = arith.constant 0 : index
    %14 = vector.load %arg4[%c0_23, %c0_24, %c0_25] : memref<4x20x20xf32, #tpu.memory_space<vmem>>, vector<4x16x20xf32>
    %c0_26 = arith.constant 0 : index
    %c1 = arith.constant 1 : index
    %c0_27 = arith.constant 0 : index
    %15 = vector.load %arg4[%c0_26, %c1, %c0_27] : memref<4x20x20xf32, #tpu.memory_space<vmem>>, vector<4x16x20xf32>
    %16 = arith.maximumf %14, %15 : vector<4x16x20xf32>
    %c0_28 = arith.constant 0 : index
    %c2_29 = arith.constant 2 : index
    %c0_30 = arith.constant 0 : index
    %17 = vector.load %arg4[%c0_28, %c2_29, %c0_30] : memref<4x20x20xf32, #tpu.memory_space<vmem>>, vector<4x16x20xf32>
    %c0_31 = arith.constant 0 : index
    %c3_32 = arith.constant 3 : index
    %c0_33 = arith.constant 0 : index
    %18 = vector.load %arg4[%c0_31, %c3_32, %c0_33] : memref<4x20x20xf32, #tpu.memory_space<vmem>>, vector<4x16x20xf32>
    %19 = arith.maximumf %17, %18 : vector<4x16x20xf32>
    %20 = arith.maximumf %16, %19 : vector<4x16x20xf32>
    %c0_34 = arith.constant 0 : index
    %c4 = arith.constant 4 : index
    %c0_35 = arith.constant 0 : index
    %21 = vector.load %arg4[%c0_34, %c4, %c0_35] : memref<4x20x20xf32, #tpu.memory_space<vmem>>, vector<4x16x20xf32>
    %22 = arith.maximumf %20, %21 : vector<4x16x20xf32>
    %23 = vector.extract_strided_slice %22 {offsets = [0, 0, 0], sizes = [4, 16, 16], strides = [1, 1, 1]} : vector<4x16x20xf32> to vector<4x16x16xf32>
    %24 = vector.extract_strided_slice %22 {offsets = [0, 0, 1], sizes = [4, 16, 16], strides = [1, 1, 1]} : vector<4x16x20xf32> to vector<4x16x16xf32>
    %25 = arith.maximumf %23, %24 : vector<4x16x16xf32>
    %26 = vector.extract_strided_slice %22 {offsets = [0, 0, 2], sizes = [4, 16, 16], strides = [1, 1, 1]} : vector<4x16x20xf32> to vector<4x16x16xf32>
    %27 = vector.extract_strided_slice %22 {offsets = [0, 0, 3], sizes = [4, 16, 16], strides = [1, 1, 1]} : vector<4x16x20xf32> to vector<4x16x16xf32>
    %28 = arith.maximumf %26, %27 : vector<4x16x16xf32>
    %29 = arith.maximumf %25, %28 : vector<4x16x16xf32>
    %30 = vector.extract_strided_slice %22 {offsets = [0, 0, 4], sizes = [4, 16, 16], strides = [1, 1, 1]} : vector<4x16x20xf32> to vector<4x16x16xf32>
    %31 = arith.maximumf %29, %30 : vector<4x16x16xf32>
    %c0_36 = arith.constant 0 : index
    %c2_37 = arith.constant 2 : index
    %c0_38 = arith.constant 0 : index
    %c0_39 = arith.constant 0 : index
    %c0_40 = arith.constant 0 : index
    %32 = vector.load %arg3[%c0_36, %c2_37, %c0_38, %c0_39, %c0_40] : memref<1x4x4x16x16xf32, #tpu.memory_space<vmem>>, vector<1x1x4x16x16xf32>
    %33 = vector.shape_cast %32 : vector<1x1x4x16x16xf32> to vector<4x16x16xf32>
    %34 = vector.shape_cast %31 : vector<4x16x16xf32> to vector<1x1x4x16x16xf32>
    tpu.vector_store %arg3[%c0_36, %c2_37, %c0_38, %c0_39, %c0_40], %34 {strides = array<i32>} : memref<1x4x4x16x16xf32, #tpu.memory_space<vmem>>, vector<1x1x4x16x16xf32>,
    %c0_41 = arith.constant 0 : index
    %c2_42 = arith.constant 2 : index
    %c2_43 = arith.constant 2 : index
    %35 = vector.load %arg4[%c0_41, %c2_42, %c2_43] : memref<4x20x20xf32, #tpu.memory_space<vmem>>, vector<4x16x16xf32>
    tpu.vector_store %arg4[%c0_41, %c2_42, %c2_43], %31 {strides = array<i32>} : memref<4x20x20xf32, #tpu.memory_space<vmem>>, vector<4x16x16xf32>,
    %c0_44 = arith.constant 0 : index
    %c0_45 = arith.constant 0 : index
    %c0_46 = arith.constant 0 : index
    %36 = vector.load %arg4[%c0_44, %c0_45, %c0_46] : memref<4x20x20xf32, #tpu.memory_space<vmem>>, vector<4x16x20xf32>
    %c0_47 = arith.constant 0 : index
    %c1_48 = arith.constant 1 : index
    %c0_49 = arith.constant 0 : index
    %37 = vector.load %arg4[%c0_47, %c1_48, %c0_49] : memref<4x20x20xf32, #tpu.memory_space<vmem>>, vector<4x16x20xf32>
    %38 = arith.maximumf %36, %37 : vector<4x16x20xf32>
    %c0_50 = arith.constant 0 : index
    %c2_51 = arith.constant 2 : index
    %c0_52 = arith.constant 0 : index
    %39 = vector.load %arg4[%c0_50, %c2_51, %c0_52] : memref<4x20x20xf32, #tpu.memory_space<vmem>>, vector<4x16x20xf32>
    %c0_53 = arith.constant 0 : index
    %c3_54 = arith.constant 3 : index
    %c0_55 = arith.constant 0 : index
    %40 = vector.load %arg4[%c0_53, %c3_54, %c0_55] : memref<4x20x20xf32, #tpu.memory_space<vmem>>, vector<4x16x20xf32>
    %41 = arith.maximumf %39, %40 : vector<4x16x20xf32>
    %42 = arith.maximumf %38, %41 : vector<4x16x20xf32>
    %c0_56 = arith.constant 0 : index
    %c4_57 = arith.constant 4 : index
    %c0_58 = arith.constant 0 : index
    %43 = vector.load %arg4[%c0_56, %c4_57, %c0_58] : memref<4x20x20xf32, #tpu.memory_space<vmem>>, vector<4x16x20xf32>
    %44 = arith.maximumf %42, %43 : vector<4x16x20xf32>
    %45 = vector.extract_strided_slice %44 {offsets = [0, 0, 0], sizes = [4, 16, 16], strides = [1, 1, 1]} : vector<4x16x20xf32> to vector<4x16x16xf32>
    %46 = vector.extract_strided_slice %44 {offsets = [0, 0, 1], sizes = [4, 16, 16], strides = [1, 1, 1]} : vector<4x16x20xf32> to vector<4x16x16xf32>
    %47 = arith.maximumf %45, %46 : vector<4x16x16xf32>
    %48 = vector.extract_strided_slice %44 {offsets = [0, 0, 2], sizes = [4, 16, 16], strides = [1, 1, 1]} : vector<4x16x20xf32> to vector<4x16x16xf32>
    %49 = vector.extract_strided_slice %44 {offsets = [0, 0, 3], sizes = [4, 16, 16], strides = [1, 1, 1]} : vector<4x16x20xf32> to vector<4x16x16xf32>
    %50 = arith.maximumf %48, %49 : vector<4x16x16xf32>
    %51 = arith.maximumf %47, %50 : vector<4x16x16xf32>
    %52 = vector.extract_strided_slice %44 {offsets = [0, 0, 4], sizes = [4, 16, 16], strides = [1, 1, 1]} : vector<4x16x20xf32> to vector<4x16x16xf32>
    %53 = arith.maximumf %51, %52 : vector<4x16x16xf32>
    %c0_59 = arith.constant 0 : index
    %c1_60 = arith.constant 1 : index
    %c0_61 = arith.constant 0 : index
    %c0_62 = arith.constant 0 : index
    %c0_63 = arith.constant 0 : index
    %54 = vector.load %arg3[%c0_59, %c1_60, %c0_61, %c0_62, %c0_63] : memref<1x4x4x16x16xf32, #tpu.memory_space<vmem>>, vector<1x1x4x16x16xf32>
    %55 = vector.shape_cast %54 : vector<1x1x4x16x16xf32> to vector<4x16x16xf32>
    %56 = vector.shape_cast %53 : vector<4x16x16xf32> to vector<1x1x4x16x16xf32>
    tpu.vector_store %arg3[%c0_59, %c1_60, %c0_61, %c0_62, %c0_63], %56 {strides = array<i32>} : memref<1x4x4x16x16xf32, #tpu.memory_space<vmem>>, vector<1x1x4x16x16xf32>,
    %c0_64 = arith.constant 0 : index
    %c2_65 = arith.constant 2 : index
    %c2_66 = arith.constant 2 : index
    %57 = vector.load %arg4[%c0_64, %c2_65, %c2_66] : memref<4x20x20xf32, #tpu.memory_space<vmem>>, vector<4x16x16xf32>
    tpu.vector_store %arg4[%c0_64, %c2_65, %c2_66], %53 {strides = array<i32>} : memref<4x20x20xf32, #tpu.memory_space<vmem>>, vector<4x16x16xf32>,
    %c0_67 = arith.constant 0 : index
    %c0_68 = arith.constant 0 : index
    %c0_69 = arith.constant 0 : index
    %58 = vector.load %arg4[%c0_67, %c0_68, %c0_69] : memref<4x20x20xf32, #tpu.memory_space<vmem>>, vector<4x16x20xf32>
    %c0_70 = arith.constant 0 : index
    %c1_71 = arith.constant 1 : index
    %c0_72 = arith.constant 0 : index
    %59 = vector.load %arg4[%c0_70, %c1_71, %c0_72] : memref<4x20x20xf32, #tpu.memory_space<vmem>>, vector<4x16x20xf32>
    %60 = arith.maximumf %58, %59 : vector<4x16x20xf32>
    %c0_73 = arith.constant 0 : index
    %c2_74 = arith.constant 2 : index
    %c0_75 = arith.constant 0 : index
    %61 = vector.load %arg4[%c0_73, %c2_74, %c0_75] : memref<4x20x20xf32, #tpu.memory_space<vmem>>, vector<4x16x20xf32>
    %c0_76 = arith.constant 0 : index
    %c3_77 = arith.constant 3 : index
    %c0_78 = arith.constant 0 : index
    %62 = vector.load %arg4[%c0_76, %c3_77, %c0_78] : memref<4x20x20xf32, #tpu.memory_space<vmem>>, vector<4x16x20xf32>
    %63 = arith.maximumf %61, %62 : vector<4x16x20xf32>
    %64 = arith.maximumf %60, %63 : vector<4x16x20xf32>
    %c0_79 = arith.constant 0 : index
    %c4_80 = arith.constant 4 : index
    %c0_81 = arith.constant 0 : index
    %65 = vector.load %arg4[%c0_79, %c4_80, %c0_81] : memref<4x20x20xf32, #tpu.memory_space<vmem>>, vector<4x16x20xf32>
    %66 = arith.maximumf %64, %65 : vector<4x16x20xf32>
    %67 = vector.extract_strided_slice %66 {offsets = [0, 0, 0], sizes = [4, 16, 16], strides = [1, 1, 1]} : vector<4x16x20xf32> to vector<4x16x16xf32>
    %68 = vector.extract_strided_slice %66 {offsets = [0, 0, 1], sizes = [4, 16, 16], strides = [1, 1, 1]} : vector<4x16x20xf32> to vector<4x16x16xf32>
    %69 = arith.maximumf %67, %68 : vector<4x16x16xf32>
    %70 = vector.extract_strided_slice %66 {offsets = [0, 0, 2], sizes = [4, 16, 16], strides = [1, 1, 1]} : vector<4x16x20xf32> to vector<4x16x16xf32>
    %71 = vector.extract_strided_slice %66 {offsets = [0, 0, 3], sizes = [4, 16, 16], strides = [1, 1, 1]} : vector<4x16x20xf32> to vector<4x16x16xf32>
    %72 = arith.maximumf %70, %71 : vector<4x16x16xf32>
    %73 = arith.maximumf %69, %72 : vector<4x16x16xf32>
    %74 = vector.extract_strided_slice %66 {offsets = [0, 0, 4], sizes = [4, 16, 16], strides = [1, 1, 1]} : vector<4x16x20xf32> to vector<4x16x16xf32>
    %75 = arith.maximumf %73, %74 : vector<4x16x16xf32>
    %c0_82 = arith.constant 0 : index
    %c0_83 = arith.constant 0 : index
    %c0_84 = arith.constant 0 : index
    %c0_85 = arith.constant 0 : index
    %c0_86 = arith.constant 0 : index
    %76 = vector.load %arg3[%c0_82, %c0_83, %c0_84, %c0_85, %c0_86] : memref<1x4x4x16x16xf32, #tpu.memory_space<vmem>>, vector<1x1x4x16x16xf32>
    %77 = vector.shape_cast %76 : vector<1x1x4x16x16xf32> to vector<4x16x16xf32>
    %78 = vector.shape_cast %75 : vector<4x16x16xf32> to vector<1x1x4x16x16xf32>
    tpu.vector_store %arg3[%c0_82, %c0_83, %c0_84, %c0_85, %c0_86], %78 {strides = array<i32>} : memref<1x4x4x16x16xf32, #tpu.memory_space<vmem>>, vector<1x1x4x16x16xf32>,
    return
  }
  func.func @transform_0(%arg0: i32, %arg1: i32) -> (i32, i32, i32, i32) {
    %c0_i32 = arith.constant 0 : i32
    %c0_i32_0 = arith.constant 0 : i32
    %c0_i32_1 = arith.constant 0 : i32
    return %arg0, %arg1, %c0_i32, %c0_i32_0 : i32, i32, i32, i32
  }
  func.func @transform_1(%arg0: i32, %arg1: i32) -> (i32, i32, i32, i32, i32) {
    %c0_i32 = arith.constant 0 : i32
    %c0_i32_0 = arith.constant 0 : i32
    %c0_i32_1 = arith.constant 0 : i32
    %c0_i32_2 = arith.constant 0 : i32
    return %arg0, %c0_i32, %arg1, %c0_i32_0, %c0_i32_1 : i32, i32, i32, i32, i32
  }
}

</mosaic_0001>

<llo_original>
// kernel: tpu_custom_call.1
$region0: #{tpu_custom_call.1}
  #allocation0 [shape = 'u32[]', space=smem, size = 0x4, offset = 0x4, fixed_abs, tag = 'smem constant byte address 0x4 - core index']
  #allocation1 [shape = 'u32[144,128]{1,0:T(1,128)}', space=vmem, size = 0x12000, scoped, tag = 'internal scratch']
  #allocation2 [shape = 'f32[4,20,20]{2,1,0:T(8,128)}', space=vmem, size = 0xc000, scoped, tag = 'scratch operand']
  %s0 = inlined_call_operand.hbm [shape: f32[2,4,16,16], index: 0, kind: input, shape index: {}]
  %s1 = inlined_call_operand.hbm [shape: f32[2,4,4,16,16], index: 1, kind: output, shape index: {}]
  %s2 = sld [smem:[#allocation0]]
  $region41: #{tpu_custom_call.1} parent=0
    _
  %s4 = ssub.s32 1, %s2
  %s5 = scalar_select 0, %s4, %s2
  $region1: #{tpu_custom_call.1} parent=0
    #allocation3 [shape = 'u8[65536]{0}', space=vmem, size = 0x10000, scoped, tag = 'input window, operand 0']
    #allocation4 [shape = 's32[2]{0}', space=sflag, size = 0x8, scoped, tag = 'scoped memory for tpu_custom_call.1']
    #allocation5 [shape = 's32[2]{0}', space=sflag, size = 0x8, scoped, tag = 'scoped memory for tpu_custom_call.1']
    #allocation6 [shape = 'u8[262144]{0}', space=vmem, size = 0x40000, scoped, tag = 'output window, operand 0']
    %6 = vsyncpa [#allocation4], 0
    %s7 = scalar_lea.sflag [#allocation4], 1
    %8 = vsyncpa %s7, 0
    %9 = vsyncpa [#allocation5], 0
    %s10 = scalar_lea.sflag [#allocation5], 1
    %11 = vsyncpa %s10, 0
    loop: start=0, step=1, limit=4
    $region2: #{tpu_custom_call.1} parent=1 // loop_pre_header
      _
    $region3: #{tpu_custom_call.1} parent=1 // loop_header
      %s13 = sphi 0, %s17
      %p14 = scmp.ge.s32.totalorder %s13, 4
      %s20 = sphi 0, %s32
      %s21 = sphi 0, %s28
      %s22 = sphi 0, %s20
      %s23 = sphi 0, %s21
      %s24 = sphi 0, %s22
      %s25 = sphi 0, %s23
      %s37 = sphi 0, %s39
      %s40 = sphi 0, %s37
      %s41 = sphi 0, %s40
      %s57 = sphi 0, %s41
      %s65 = sphi 0, %s67
      %s68 = sphi 0, %s65
      %s69 = sphi 0, %s68
      %s85 = sphi 0, %s69
    $region4: #{tpu_custom_call.1} parent=1 // loop_header_branch
      %16 = sbr.rel (%p14) target = $region8
    $region5: #{tpu_custom_call.1} parent=1 // loop_body
      %s18 = ssub.s32 %s13, 1
      %s19 = ssub.s32 %s13, 2
      %s26 = sadd.s32 1, %s21
      %p27 = scmp.ge.s32.totalorder %s26, 1
      %s28 = scalar_select %p27, 0, %s26
      %s29 = sadd.s32 1, %s20
      %s30 = scalar_select %p27, %s29, %s20
      %p31 = scmp.ge.s32.totalorder %s30, 2
      %s32 = scalar_select %p31, 0, %s30
      %s33 = ssub.s32 %s20, %s32
      %s34 = ssub.s32 %s21, %s28
      %s35 = sor.u32 %s33, %s34
      %p36 = scmp.eq.s32.totalorder %s35, 0
      %s38 = sadd.s32 %s37, 1
      %s39 = scalar_select %p36, %s37, %s38
      %p42 = pneg %p36
      %p43 = scmp.eq.s32.totalorder %s13, 1
      %p44 = por %p42, %p43
      %p45 = scmp.ne.s32.totalorder %s37, %s40
      %p46 = scmp.eq.s32.totalorder %s13, 0
      %p47 = por %p45, %p46
      %p48 = scmp.ne.s32.totalorder %s37, %s40
      %p49 = scmp.eq.s32.totalorder %s18, 1
      %p50 = por %p48, %p49
      %p51 = scmp.ne.s32.totalorder %s40, %s41
      %p52 = scmp.eq.s32.totalorder %s18, 0
      %p53 = por %p51, %p52
      %p54 = scmp.ne.s32.totalorder %s40, %s41
      %p55 = scmp.eq.s32.totalorder %s19, 1
      %p56 = por %p54, %p55
      %p58 = scmp.ne.s32.totalorder %s41, %s57
      %p59 = scmp.eq.s32.totalorder %s19, 0
      %p60 = por %p58, %p59
      %s61 = ssub.s32 %s20, %s32
      %s62 = ssub.s32 %s21, %s28
      %s63 = sor.u32 %s61, %s62
      %p64 = scmp.eq.s32.totalorder %s63, 0
      %s66 = sadd.s32 %s65, 1
      %s67 = scalar_select %p64, %s65, %s66
      %p70 = pneg %p64
      %p71 = scmp.eq.s32.totalorder %s13, 1
      %p72 = por %p70, %p71
      %p73 = scmp.ne.s32.totalorder %s65, %s68
      %p74 = scmp.eq.s32.totalorder %s13, 0
      %p75 = por %p73, %p74
      %p76 = scmp.ne.s32.totalorder %s65, %s68
      %p77 = scmp.eq.s32.totalorder %s18, 1
      %p78 = por %p76, %p77
      %p79 = scmp.ne.s32.totalorder %s68, %s69
      %p80 = scmp.eq.s32.totalorder %s18, 0
      %p81 = por %p79, %p80
      %p82 = scmp.ne.s32.totalorder %s68, %s69
      %p83 = scmp.eq.s32.totalorder %s19, 1
      %p84 = por %p82, %p83
      %p86 = scmp.ne.s32.totalorder %s69, %s85
      %p87 = scmp.eq.s32.totalorder %s19, 0
      %p88 = por %p86, %p87
      %p89 = scmp.le.s32.totalorder 1, %s13
      %p90 = scmp.lt.s32.totalorder %s13, 3
      %p91 = pnand %p89, %p90
      %p92 = pneg %p91
      // Predicated region
      $region9: #{tpu_custom_call.1} parent=5 // pred_check
        _
      $region10: #{tpu_custom_call.1} parent=5 // pred_check_branch
        %94 = sbr.rel (%p91) target = $region12
      $region11: #{tpu_custom_call.1} parent=5 // pred_region
        %s95 = ssub.s32 %s13, 1
      $region12: #{tpu_custom_call.1} parent=5 // pred_fallthru
        _
      %p96 = scmp.lt.s32.totalorder %s13, 2
      // Predicated region
      $region13: #{tpu_custom_call.1} parent=5 // pred_check
        %p97 = pneg %p96
      $region14: #{tpu_custom_call.1} parent=5 // pred_check_branch
        %99 = sbr.rel (%p97) target = $region16
      $region15: #{tpu_custom_call.1} parent=5 // pred_region
        // Predicated region
        $region17: #{tpu_custom_call.1} parent=15 // pred_check
          %p100 = pneg %p47
        $region18: #{tpu_custom_call.1} parent=15 // pred_check_branch
          %102 = sbr.rel (%p100) target = $region20
        $region19: #{tpu_custom_call.1} parent=15 // pred_region
          %s103 = sand.u32 %s37, 1
          %s104 = scalar_lea.sflag [#allocation4], %s103
          %s105 = sand.u32 %s37, 1
          %s106 = smul.addr %s105, 64
          %s107 = scalar_lea.vmem [#allocation3], %s106
          %s108 = smul.u32 4, %s21
          %s110 = ssub.s32 1024, 1024
          %111 = vsyncadd %s104, %s110
          %s112 = smul.addr %s108, 2
          %s113 = smul.addr %s20, 8
          %s114 = sadd.s32 %s112, %s113
          %s115 = smul.addr %s114, 128
          %s116 = scalar_lea.hbm %s0, %s115
          %s117 = sshll.u32 %s107, 4
          %s118 = int_to_ptr.vmem [resolvable:$true] %s117
          %123 = dma.hbm_to_vmem [thread:$0]  %s116, 1024, %s118, %s104, 128, 128, 8
        $region20: #{tpu_custom_call.1} parent=15 // pred_fallthru
          _
      $region16: #{tpu_custom_call.1} parent=5 // pred_fallthru
        _
      %p124 = scmp.le.s32.totalorder 1, %s13
      %p125 = scmp.lt.s32.totalorder %s13, 3
      %p126 = pnand %p124, %p125
      %p127 = pneg %p126
      // Predicated region
      $region21: #{tpu_custom_call.1} parent=5 // pred_check
        _
      $region22: #{tpu_custom_call.1} parent=5 // pred_check_branch
        %129 = sbr.rel (%p126) target = $region24
      $region23: #{tpu_custom_call.1} parent=5 // pred_region
        %s130 = ssub.s32 %s13, 1
        %s131 = sand.u32 %s40, 1
        %s132 = scalar_lea.sflag [#allocation4], %s131
        %s133 = sand.u32 %s40, 1
        %s134 = smul.addr %s133, 64
        %s135 = scalar_lea.vmem [#allocation3], %s134
        // Predicated region
        $region25: #{tpu_custom_call.1} parent=23 // pred_check
          %p136 = pneg %p53
        $region26: #{tpu_custom_call.1} parent=23 // pred_check_branch
          %138 = sbr.rel (%p136) target = $region28
        $region27: #{tpu_custom_call.1} parent=23 // pred_region
          %139 = dma.done %s132, 1024
        $region28: #{tpu_custom_call.1} parent=23 // pred_fallthru
          _
        %s140 = sand.u32 %s40, 1
        %s141 = scalar_lea.sflag [#allocation4], %s140
        %s142 = sand.u32 %s40, 1
        %s143 = smul.addr %s142, 64
        %s144 = scalar_lea.vmem [#allocation3], %s143
        %p145 = pneg %p53
        %p146 = pneg %p50
        %p147 = pneg %p81
        %p148 = pneg %p78
        %s149 = sand.u32 %s68, 1
        %s150 = scalar_lea.sflag [#allocation5], %s149
        %s151 = sand.u32 %s68, 1
        %s152 = smul.addr %s151, 256
        %s153 = scalar_lea.vmem [#allocation6], %s152
        %s154 = smul.u32 4, %s23
        %s155 = smul.u32 4, %s23
        %vm156 = vcmask 156672
        %157 = vst.msk [vmem:[#allocation2] sm:$0x3] %vm156, -inf
        %158 = vst.msk [vmem:[#allocation2 + $0x18] sm:$0x3] %vm156, -inf
        %159 = vst.msk [vmem:[#allocation2 + $0x30] sm:$0x3] %vm156, -inf
        %160 = vst.msk [vmem:[#allocation2 + $0x48] sm:$0x3] %vm156, -inf
        %161 = vst.msk [vmem:[#allocation2 + $0x12] sm:$0x3] %vm156, -inf
        %162 = vst.msk [vmem:[#allocation2 + $0x2a] sm:$0x3] %vm156, -inf
        %163 = vst.msk [vmem:[#allocation2 + $0x42] sm:$0x3] %vm156, -inf
        %164 = vst.msk [vmem:[#allocation2 + $0x5a] sm:$0x3] %vm156, -inf
        %vm165 = vcmask 15360
        %166 = vst.msk [vmem:[#allocation2] sm:$0xff] %vm165, -inf
        %167 = vst.msk [vmem:[#allocation2 + $0x8] sm:$0xff] %vm165, -inf
        %vm168 = vcmask 11264
        %169 = vst.msk [vmem:[#allocation2 + $0x10] sm:$0xf] %vm168, -inf
        %170 = vst.msk [vmem:[#allocation2 + $0x18] sm:$0xff] %vm165, -inf
        %171 = vst.msk [vmem:[#allocation2 + $0x20] sm:$0xff] %vm165, -inf
        %172 = vst.msk [vmem:[#allocation2 + $0x28] sm:$0xf] %vm168, -inf
        %173 = vst.msk [vmem:[#allocation2 + $0x30] sm:$0xff] %vm165, -inf
        %174 = vst.msk [vmem:[#allocation2 + $0x38] sm:$0xff] %vm165, -inf
        %175 = vst.msk [vmem:[#allocation2 + $0x40] sm:$0xf] %vm168, -inf
        %176 = vst.msk [vmem:[#allocation2 + $0x48] sm:$0xff] %vm165, -inf
        %177 = vst.msk [vmem:[#allocation2 + $0x50] sm:$0xff] %vm165, -inf
        %178 = vst.msk [vmem:[#allocation2 + $0x58] sm:$0xf] %vm168, -inf
        %vm179 = vcmask 162960
        %180 = vst.msk [vmem:[#allocation2] sm:$0xff] %vm179, -inf
        %181 = vst.msk [vmem:[#allocation2 + $0x8] sm:$0xff] %vm179, -inf
        %vm182 = vcmask 158864
        %183 = vst.msk [vmem:[#allocation2 + $0x10] sm:$0xf] %vm182, -inf
        %184 = vst.msk [vmem:[#allocation2 + $0x18] sm:$0xff] %vm179, -inf
        %185 = vst.msk [vmem:[#allocation2 + $0x20] sm:$0xff] %vm179, -inf
        %186 = vst.msk [vmem:[#allocation2 + $0x28] sm:$0xf] %vm182, -inf
        %187 = vst.msk [vmem:[#allocation2 + $0x30] sm:$0xff] %vm179, -inf
        %188 = vst.msk [vmem:[#allocation2 + $0x38] sm:$0xff] %vm179, -inf
        %189 = vst.msk [vmem:[#allocation2 + $0x40] sm:$0xf] %vm182, -inf
        %190 = vst.msk [vmem:[#allocation2 + $0x48] sm:$0xff] %vm179, -inf
        %191 = vst.msk [vmem:[#allocation2 + $0x50] sm:$0xff] %vm179, -inf
        %192 = vst.msk [vmem:[#allocation2 + $0x58] sm:$0xf] %vm182, -inf
        %v193 = vld [vmem:[%s135] sm:$0xff]
        %v194 = vld [vmem:[%s135 + $0x8] sm:$0xff]
        %v195 = vld [vmem:[%s135 + $0x10] sm:$0xff]
        %v196 = vld [vmem:[%s135 + $0x18] sm:$0xff]
        %v197 = vld [vmem:[%s135 + $0x20] sm:$0xff]
        %v198 = vld [vmem:[%s135 + $0x28] sm:$0xff]
        %v199 = vld [vmem:[%s135 + $0x30] sm:$0xff]
        %v200 = vld [vmem:[%s135 + $0x38] sm:$0xff]
        %s201 = scalar_lea.vmem %s153, 192 [#allocation6]
        %vm202 = vcmask 130048
        %203 = vst.msk [vmem:[%s201] sm:$0xff] %vm202, %v193
        %204 = vst.msk [vmem:[%s201 + $0x8] sm:$0xff] %vm202, %v194
        %205 = vst.msk [vmem:[%s201 + $0x10] sm:$0xff] %vm202, %v195
        %206 = vst.msk [vmem:[%s201 + $0x18] sm:$0xff] %vm202, %v196
        %207 = vst.msk [vmem:[%s201 + $0x20] sm:$0xff] %vm202, %v197
        %208 = vst.msk [vmem:[%s201 + $0x28] sm:$0xff] %vm202, %v198
        %209 = vst.msk [vmem:[%s201 + $0x30] sm:$0xff] %vm202, %v199
        %210 = vst.msk [vmem:[%s201 + $0x38] sm:$0xff] %vm202, %v200
        %219 = vrot.lane.b32.xlu0 %v193, 2
        %v220 = vpop.permute.xlu0 %219
        %221 = vrot.lane.b32.xlu0 %v194, 2
        %v222 = vpop.permute.xlu0 %221
        %223 = vrot.lane.b32.xlu0 %v195, 2
        %v224 = vpop.permute.xlu0 %223
        %225 = vrot.lane.b32.xlu0 %v196, 2
        %v226 = vpop.permute.xlu0 %225
        %227 = vrot.lane.b32.xlu0 %v197, 2
        %v228 = vpop.permute.xlu0 %227
        %229 = vrot.lane.b32.xlu0 %v198, 2
        %v230 = vpop.permute.xlu0 %229
        %231 = vrot.lane.b32.xlu0 %v199, 2
        %v232 = vpop.permute.xlu0 %231
        %233 = vrot.lane.b32.xlu0 %v200, 2
        %v234 = vpop.permute.xlu0 %233
        %vm243 = vcmask 146448
        %244 = vst.msk [vmem:[#allocation2 + $0x2] sm:$0xff] %vm243, %v220
        %245 = vst.msk [vmem:[#allocation2 + $0xa] sm:$0xff] %vm243, %v222
        %246 = vst.msk [vmem:[#allocation2 + $0x1a] sm:$0xff] %vm243, %v224
        %247 = vst.msk [vmem:[#allocation2 + $0x22] sm:$0xff] %vm243, %v226
        %248 = vst.msk [vmem:[#allocation2 + $0x32] sm:$0xff] %vm243, %v228
        %249 = vst.msk [vmem:[#allocation2 + $0x3a] sm:$0xff] %vm243, %v230
        %250 = vst.msk [vmem:[#allocation2 + $0x4a] sm:$0xff] %vm243, %v232
        %251 = vst.msk [vmem:[#allocation2 + $0x52] sm:$0xff] %vm243, %v234
        %v252 = vld [vmem:[#allocation2] sm:$0xff]
        %v253 = vld [vmem:[#allocation2 + $0x8] sm:$0xff]
        %v254 = vld [vmem:[#allocation2 + $0x18] sm:$0xff]
        %v255 = vld [vmem:[#allocation2 + $0x20] sm:$0xff]
        %v256 = vld [vmem:[#allocation2 + $0x30] sm:$0xff]
        %v257 = vld [vmem:[#allocation2 + $0x38] sm:$0xff]
        %v258 = vld [vmem:[#allocation2 + $0x48] sm:$0xff]
        %v259 = vld [vmem:[#allocation2 + $0x50] sm:$0xff]
        %v260 = vld [vmem:[#allocation2 + $0x1] sm:$0xff]
        %v261 = vld [vmem:[#allocation2 + $0x9] sm:$0xff]
        %v262 = vld [vmem:[#allocation2 + $0x19] sm:$0xff]
        %v263 = vld [vmem:[#allocation2 + $0x21] sm:$0xff]
        %v264 = vld [vmem:[#allocation2 + $0x31] sm:$0xff]
        %v265 = vld [vmem:[#allocation2 + $0x39] sm:$0xff]
        %v266 = vld [vmem:[#allocation2 + $0x49] sm:$0xff]
        %v267 = vld [vmem:[#allocation2 + $0x51] sm:$0xff]
        %v268 = vmax.f32 %v252, %v260
        %v269 = vmax.f32 %v253, %v261
        %v270 = vmax.f32 %v254, %v262
        %v271 = vmax.f32 %v255, %v263
        %v272 = vmax.f32 %v256, %v264
        %v273 = vmax.f32 %v257, %v265
        %v274 = vmax.f32 %v258, %v266
        %v275 = vmax.f32 %v259, %v267
        %v276 = vld [vmem:[#allocation2 + $0x2] sm:$0xff]
        %v277 = vld [vmem:[#allocation2 + $0xa] sm:$0xff]
        %v278 = vld [vmem:[#allocation2 + $0x1a] sm:$0xff]
        %v279 = vld [vmem:[#allocation2 + $0x22] sm:$0xff]
        %v280 = vld [vmem:[#allocation2 + $0x32] sm:$0xff]
        %v281 = vld [vmem:[#allocation2 + $0x3a] sm:$0xff]
        %v282 = vld [vmem:[#allocation2 + $0x4a] sm:$0xff]
        %v283 = vld [vmem:[#allocation2 + $0x52] sm:$0xff]
        %v284 = vld [vmem:[#allocation2 + $0x3] sm:$0xff]
        %v285 = vld [vmem:[#allocation2 + $0xb] sm:$0xff]
        %v286 = vld [vmem:[#allocation2 + $0x1b] sm:$0xff]
        %v287 = vld [vmem:[#allocation2 + $0x23] sm:$0xff]
        %v288 = vld [vmem:[#allocation2 + $0x33] sm:$0xff]
        %v289 = vld [vmem:[#allocation2 + $0x3b] sm:$0xff]
        %v290 = vld [vmem:[#allocation2 + $0x4b] sm:$0xff]
        %v291 = vld [vmem:[#allocation2 + $0x53] sm:$0xff]
        %v292 = vmax.f32 %v276, %v284
        %v293 = vmax.f32 %v277, %v285
        %v294 = vmax.f32 %v278, %v286
        %v295 = vmax.f32 %v279, %v287
        %v296 = vmax.f32 %v280, %v288
        %v297 = vmax.f32 %v281, %v289
        %v298 = vmax.f32 %v282, %v290
        %v299 = vmax.f32 %v283, %v291
        %v300 = vmax.f32 %v268, %v292
        %v301 = vmax.f32 %v269, %v293
        %v302 = vmax.f32 %v270, %v294
        %v303 = vmax.f32 %v271, %v295
        %v304 = vmax.f32 %v272, %v296
        %v305 = vmax.f32 %v273, %v297
        %v306 = vmax.f32 %v274, %v298
        %v307 = vmax.f32 %v275, %v299
        %v308 = vld [vmem:[#allocation2 + $0x4] sm:$0xff]
        %v309 = vld [vmem:[#allocation2 + $0xc] sm:$0xff]
        %v310 = vld [vmem:[#allocation2 + $0x1c] sm:$0xff]
        %v311 = vld [vmem:[#allocation2 + $0x24] sm:$0xff]
        %v312 = vld [vmem:[#allocation2 + $0x34] sm:$0xff]
        %v313 = vld [vmem:[#allocation2 + $0x3c] sm:$0xff]
        %v314 = vld [vmem:[#allocation2 + $0x4c] sm:$0xff]
        %v315 = vld [vmem:[#allocation2 + $0x54] sm:$0xff]
        %v316 = vmax.f32 %v300, %v308
        %v317 = vmax.f32 %v301, %v309
        %v318 = vmax.f32 %v302, %v310
        %v319 = vmax.f32 %v303, %v311
        %v320 = vmax.f32 %v304, %v312
        %v321 = vmax.f32 %v305, %v313
        %v322 = vmax.f32 %v306, %v314
        %v323 = vmax.f32 %v307, %v315
        %332 = vrot.lane.b32.xlu0 %v316, 127
        %v333 = vpop.permute.xlu0 %332
        %334 = vrot.lane.b32.xlu0 %v317, 127
        %v335 = vpop.permute.xlu0 %334
        %336 = vrot.lane.b32.xlu0 %v318, 127
        %v337 = vpop.permute.xlu0 %336
        %338 = vrot.lane.b32.xlu0 %v319, 127
        %v339 = vpop.permute.xlu0 %338
        %340 = vrot.lane.b32.xlu0 %v320, 127
        %v341 = vpop.permute.xlu0 %340
        %342 = vrot.lane.b32.xlu0 %v321, 127
        %v343 = vpop.permute.xlu0 %342
        %344 = vrot.lane.b32.xlu0 %v322, 127
        %v345 = vpop.permute.xlu0 %344
        %346 = vrot.lane.b32.xlu0 %v323, 127
        %v347 = vpop.permute.xlu0 %346
        %v356 = vmax.f32 %v316, %v333
        %v357 = vmax.f32 %v317, %v335
        %v358 = vmax.f32 %v318, %v337
        %v359 = vmax.f32 %v319, %v339
        %v360 = vmax.f32 %v320, %v341
        %v361 = vmax.f32 %v321, %v343
        %v362 = vmax.f32 %v322, %v345
        %v363 = vmax.f32 %v323, %v347
        %372 = vrot.lane.b32.xlu0 %v356, 126
        %v373 = vpop.permute.xlu0 %372
        %374 = vrot.lane.b32.xlu0 %v357, 126
        %v375 = vpop.permute.xlu0 %374
        %376 = vrot.lane.b32.xlu0 %v358, 126
        %v377 = vpop.permute.xlu0 %376
        %378 = vrot.lane.b32.xlu0 %v359, 126
        %v379 = vpop.permute.xlu0 %378
        %380 = vrot.lane.b32.xlu0 %v360, 126
        %v381 = vpop.permute.xlu0 %380
        %382 = vrot.lane.b32.xlu0 %v361, 126
        %v383 = vpop.permute.xlu0 %382
        %384 = vrot.lane.b32.xlu0 %v362, 126
        %v385 = vpop.permute.xlu0 %384
        %386 = vrot.lane.b32.xlu0 %v363, 126
        %v387 = vpop.permute.xlu0 %386
        %v396 = vmax.f32 %v356, %v373
        %v397 = vmax.f32 %v357, %v375
        %v398 = vmax.f32 %v358, %v377
        %v399 = vmax.f32 %v359, %v379
        %v400 = vmax.f32 %v360, %v381
        %v401 = vmax.f32 %v361, %v383
        %v402 = vmax.f32 %v362, %v385
        %v403 = vmax.f32 %v363, %v387
        %404 = vrot.lane.b32.xlu0 %v316, 124
        %v405 = vpop.permute.xlu0 %404
        %406 = vrot.lane.b32.xlu0 %v317, 124
        %v407 = vpop.permute.xlu0 %406
        %408 = vrot.lane.b32.xlu0 %v318, 124
        %v409 = vpop.permute.xlu0 %408
        %410 = vrot.lane.b32.xlu0 %v319, 124
        %v411 = vpop.permute.xlu0 %410
        %412 = vrot.lane.b32.xlu0 %v320, 124
        %v413 = vpop.permute.xlu0 %412
        %414 = vrot.lane.b32.xlu0 %v321, 124
        %v415 = vpop.permute.xlu0 %414
        %416 = vrot.lane.b32.xlu0 %v322, 124
        %v417 = vpop.permute.xlu0 %416
        %418 = vrot.lane.b32.xlu0 %v323, 124
        %v419 = vpop.permute.xlu0 %418
        %v428 = vmax.f32 %v396, %v405
        %v429 = vmax.f32 %v397, %v407
        %v430 = vmax.f32 %v398, %v409
        %v431 = vmax.f32 %v399, %v411
        %v432 = vmax.f32 %v400, %v413
        %v433 = vmax.f32 %v401, %v415
        %v434 = vmax.f32 %v402, %v417
        %v435 = vmax.f32 %v403, %v419
        %s436 = scalar_lea.vmem %s153, 128 [#allocation6]
        %437 = vst.msk [vmem:[%s436] sm:$0xff] %vm202, %v428
        %438 = vst.msk [vmem:[%s436 + $0x8] sm:$0xff] %vm202, %v429
        %439 = vst.msk [vmem:[%s436 + $0x10] sm:$0xff] %vm202, %v430
        %440 = vst.msk [vmem:[%s436 + $0x18] sm:$0xff] %vm202, %v431
        %441 = vst.msk [vmem:[%s436 + $0x20] sm:$0xff] %vm202, %v432
        %442 = vst.msk [vmem:[%s436 + $0x28] sm:$0xff] %vm202, %v433
        %443 = vst.msk [vmem:[%s436 + $0x30] sm:$0xff] %vm202, %v434
        %444 = vst.msk [vmem:[%s436 + $0x38] sm:$0xff] %vm202, %v435
        %453 = vrot.lane.b32.xlu0 %v428, 2
        %v454 = vpop.permute.xlu0 %453
        %455 = vrot.lane.b32.xlu0 %v429, 2
        %v456 = vpop.permute.xlu0 %455
        %457 = vrot.lane.b32.xlu0 %v430, 2
        %v458 = vpop.permute.xlu0 %457
        %459 = vrot.lane.b32.xlu0 %v431, 2
        %v460 = vpop.permute.xlu0 %459
        %461 = vrot.lane.b32.xlu0 %v432, 2
        %v462 = vpop.permute.xlu0 %461
        %463 = vrot.lane.b32.xlu0 %v433, 2
        %v464 = vpop.permute.xlu0 %463
        %465 = vrot.lane.b32.xlu0 %v434, 2
        %v466 = vpop.permute.xlu0 %465
        %467 = vrot.lane.b32.xlu0 %v435, 2
        %v468 = vpop.permute.xlu0 %467
        %477 = vst.msk [vmem:[#allocation2 + $0x2] sm:$0xff] %vm243, %v454
        %478 = vst.msk [vmem:[#allocation2 + $0xa] sm:$0xff] %vm243, %v456
        %479 = vst.msk [vmem:[#allocation2 + $0x1a] sm:$0xff] %vm243, %v458
        %480 = vst.msk [vmem:[#allocation2 + $0x22] sm:$0xff] %vm243, %v460
        %481 = vst.msk [vmem:[#allocation2 + $0x32] sm:$0xff] %vm243, %v462
        %482 = vst.msk [vmem:[#allocation2 + $0x3a] sm:$0xff] %vm243, %v464
        %483 = vst.msk [vmem:[#allocation2 + $0x4a] sm:$0xff] %vm243, %v466
        %484 = vst.msk [vmem:[#allocation2 + $0x52] sm:$0xff] %vm243, %v468
        %v485 = vld [vmem:[#allocation2] sm:$0xff]
        %v486 = vld [vmem:[#allocation2 + $0x8] sm:$0xff]
        %v487 = vld [vmem:[#allocation2 + $0x18] sm:$0xff]
        %v488 = vld [vmem:[#allocation2 + $0x20] sm:$0xff]
        %v489 = vld [vmem:[#allocation2 + $0x30] sm:$0xff]
        %v490 = vld [vmem:[#allocation2 + $0x38] sm:$0xff]
        %v491 = vld [vmem:[#allocation2 + $0x48] sm:$0xff]
        %v492 = vld [vmem:[#allocation2 + $0x50] sm:$0xff]
        %v493 = vld [vmem:[#allocation2 + $0x1] sm:$0xff]
        %v494 = vld [vmem:[#allocation2 + $0x9] sm:$0xff]
        %v495 = vld [vmem:[#allocation2 + $0x19] sm:$0xff]
        %v496 = vld [vmem:[#allocation2 + $0x21] sm:$0xff]
        %v497 = vld [vmem:[#allocation2 + $0x31] sm:$0xff]
        %v498 = vld [vmem:[#allocation2 + $0x39] sm:$0xff]
        %v499 = vld [vmem:[#allocation2 + $0x49] sm:$0xff]
        %v500 = vld [vmem:[#allocation2 + $0x51] sm:$0xff]
        %v501 = vmax.f32 %v485, %v493
        %v502 = vmax.f32 %v486, %v494
        %v503 = vmax.f32 %v487, %v495
        %v504 = vmax.f32 %v488, %v496
        %v505 = vmax.f32 %v489, %v497
        %v506 = vmax.f32 %v490, %v498
        %v507 = vmax.f32 %v491, %v499
        %v508 = vmax.f32 %v492, %v500
        %v509 = vld [vmem:[#allocation2 + $0x2] sm:$0xff]
        %v510 = vld [vmem:[#allocation2 + $0xa] sm:$0xff]
        %v511 = vld [vmem:[#allocation2 + $0x1a] sm:$0xff]
        %v512 = vld [vmem:[#allocation2 + $0x22] sm:$0xff]
        %v513 = vld [vmem:[#allocation2 + $0x32] sm:$0xff]
        %v514 = vld [vmem:[#allocation2 + $0x3a] sm:$0xff]
        %v515 = vld [vmem:[#allocation2 + $0x4a] sm:$0xff]
        %v516 = vld [vmem:[#allocation2 + $0x52] sm:$0xff]
        %v517 = vld [vmem:[#allocation2 + $0x3] sm:$0xff]
        %v518 = vld [vmem:[#allocation2 + $0xb] sm:$0xff]
        %v519 = vld [vmem:[#allocation2 + $0x1b] sm:$0xff]
        %v520 = vld [vmem:[#allocation2 + $0x23] sm:$0xff]
        %v521 = vld [vmem:[#allocation2 + $0x33] sm:$0xff]
        %v522 = vld [vmem:[#allocation2 + $0x3b] sm:$0xff]
        %v523 = vld [vmem:[#allocation2 + $0x4b] sm:$0xff]
        %v524 = vld [vmem:[#allocation2 + $0x53] sm:$0xff]
        %v525 = vmax.f32 %v509, %v517
        %v526 = vmax.f32 %v510, %v518
        %v527 = vmax.f32 %v511, %v519
        %v528 = vmax.f32 %v512, %v520
        %v529 = vmax.f32 %v513, %v521
        %v530 = vmax.f32 %v514, %v522
        %v531 = vmax.f32 %v515, %v523
        %v532 = vmax.f32 %v516, %v524
        %v533 = vmax.f32 %v501, %v525
        %v534 = vmax.f32 %v502, %v526
        %v535 = vmax.f32 %v503, %v527
        %v536 = vmax.f32 %v504, %v528
        %v537 = vmax.f32 %v505, %v529
        %v538 = vmax.f32 %v506, %v530
        %v539 = vmax.f32 %v507, %v531
        %v540 = vmax.f32 %v508, %v532
        %v541 = vld [vmem:[#allocation2 + $0x4] sm:$0xff]
        %v542 = vld [vmem:[#allocation2 + $0xc] sm:$0xff]
        %v543 = vld [vmem:[#allocation2 + $0x1c] sm:$0xff]
        %v544 = vld [vmem:[#allocation2 + $0x24] sm:$0xff]
        %v545 = vld [vmem:[#allocation2 + $0x34] sm:$0xff]
        %v546 = vld [vmem:[#allocation2 + $0x3c] sm:$0xff]
        %v547 = vld [vmem:[#allocation2 + $0x4c] sm:$0xff]
        %v548 = vld [vmem:[#allocation2 + $0x54] sm:$0xff]
        %v549 = vmax.f32 %v533, %v541
        %v550 = vmax.f32 %v534, %v542
        %v551 = vmax.f32 %v535, %v543
        %v552 = vmax.f32 %v536, %v544
        %v553 = vmax.f32 %v537, %v545
        %v554 = vmax.f32 %v538, %v546
        %v555 = vmax.f32 %v539, %v547
        %v556 = vmax.f32 %v540, %v548
        %565 = vrot.lane.b32.xlu0 %v549, 127
        %v566 = vpop.permute.xlu0 %565
        %567 = vrot.lane.b32.xlu0 %v550, 127
        %v568 = vpop.permute.xlu0 %567
        %569 = vrot.lane.b32.xlu0 %v551, 127
        %v570 = vpop.permute.xlu0 %569
        %571 = vrot.lane.b32.xlu0 %v552, 127
        %v572 = vpop.permute.xlu0 %571
        %573 = vrot.lane.b32.xlu0 %v553, 127
        %v574 = vpop.permute.xlu0 %573
        %575 = vrot.lane.b32.xlu0 %v554, 127
        %v576 = vpop.permute.xlu0 %575
        %577 = vrot.lane.b32.xlu0 %v555, 127
        %v578 = vpop.permute.xlu0 %577
        %579 = vrot.lane.b32.xlu0 %v556, 127
        %v580 = vpop.permute.xlu0 %579
        %v589 = vmax.f32 %v549, %v566
        %v590 = vmax.f32 %v550, %v568
        %v591 = vmax.f32 %v551, %v570
        %v592 = vmax.f32 %v552, %v572
        %v593 = vmax.f32 %v553, %v574
        %v594 = vmax.f32 %v554, %v576
        %v595 = vmax.f32 %v555, %v578
        %v596 = vmax.f32 %v556, %v580
        %605 = vrot.lane.b32.xlu0 %v589, 126
        %v606 = vpop.permute.xlu0 %605
        %607 = vrot.lane.b32.xlu0 %v590, 126
        %v608 = vpop.permute.xlu0 %607
        %609 = vrot.lane.b32.xlu0 %v591, 126
        %v610 = vpop.permute.xlu0 %609
        %611 = vrot.lane.b32.xlu0 %v592, 126
        %v612 = vpop.permute.xlu0 %611
        %613 = vrot.lane.b32.xlu0 %v593, 126
        %v614 = vpop.permute.xlu0 %613
        %615 = vrot.lane.b32.xlu0 %v594, 126
        %v616 = vpop.permute.xlu0 %615
        %617 = vrot.lane.b32.xlu0 %v595, 126
        %v618 = vpop.permute.xlu0 %617
        %619 = vrot.lane.b32.xlu0 %v596, 126
        %v620 = vpop.permute.xlu0 %619
        %v629 = vmax.f32 %v589, %v606
        %v630 = vmax.f32 %v590, %v608
        %v631 = vmax.f32 %v591, %v610
        %v632 = vmax.f32 %v592, %v612
        %v633 = vmax.f32 %v593, %v614
        %v634 = vmax.f32 %v594, %v616
        %v635 = vmax.f32 %v595, %v618
        %v636 = vmax.f32 %v596, %v620
        %637 = vrot.lane.b32.xlu0 %v549, 124
        %v638 = vpop.permute.xlu0 %637
        %639 = vrot.lane.b32.xlu0 %v550, 124
        %v640 = vpop.permute.xlu0 %639
        %641 = vrot.lane.b32.xlu0 %v551, 124
        %v642 = vpop.permute.xlu0 %641
        %643 = vrot.lane.b32.xlu0 %v552, 124
        %v644 = vpop.permute.xlu0 %643
        %645 = vrot.lane.b32.xlu0 %v553, 124
        %v646 = vpop.permute.xlu0 %645
        %647 = vrot.lane.b32.xlu0 %v554, 124
        %v648 = vpop.permute.xlu0 %647
        %649 = vrot.lane.b32.xlu0 %v555, 124
        %v650 = vpop.permute.xlu0 %649
        %651 = vrot.lane.b32.xlu0 %v556, 124
        %v652 = vpop.permute.xlu0 %651
        %v661 = vmax.f32 %v629, %v638
        %v662 = vmax.f32 %v630, %v640
        %v663 = vmax.f32 %v631, %v642
        %v664 = vmax.f32 %v632, %v644
        %v665 = vmax.f32 %v633, %v646
        %v666 = vmax.f32 %v634, %v648
        %v667 = vmax.f32 %v635, %v650
        %v668 = vmax.f32 %v636, %v652
        %s669 = scalar_lea.vmem %s153, 64 [#allocation6]
        %670 = vst.msk [vmem:[%s669] sm:$0xff] %vm202, %v661
        %671 = vst.msk [vmem:[%s669 + $0x8] sm:$0xff] %vm202, %v662
        %672 = vst.msk [vmem:[%s669 + $0x10] sm:$0xff] %vm202, %v663
        %673 = vst.msk [vmem:[%s669 + $0x18] sm:$0xff] %vm202, %v664
        %674 = vst.msk [vmem:[%s669 + $0x20] sm:$0xff] %vm202, %v665
        %675 = vst.msk [vmem:[%s669 + $0x28] sm:$0xff] %vm202, %v666
        %676 = vst.msk [vmem:[%s669 + $0x30] sm:$0xff] %vm202, %v667
        %677 = vst.msk [vmem:[%s669 + $0x38] sm:$0xff] %vm202, %v668
        %686 = vrot.lane.b32.xlu0 %v661, 2
        %v687 = vpop.permute.xlu0 %686
        %688 = vrot.lane.b32.xlu0 %v662, 2
        %v689 = vpop.permute.xlu0 %688
        %690 = vrot.lane.b32.xlu0 %v663, 2
        %v691 = vpop.permute.xlu0 %690
        %692 = vrot.lane.b32.xlu0 %v664, 2
        %v693 = vpop.permute.xlu0 %692
        %694 = vrot.lane.b32.xlu0 %v665, 2
        %v695 = vpop.permute.xlu0 %694
        %696 = vrot.lane.b32.xlu0 %v666, 2
        %v697 = vpop.permute.xlu0 %696
        %698 = vrot.lane.b32.xlu0 %v667, 2
        %v699 = vpop.permute.xlu0 %698
        %700 = vrot.lane.b32.xlu0 %v668, 2
        %v701 = vpop.permute.xlu0 %700
        %710 = vst.msk [vmem:[#allocation2 + $0x2] sm:$0xff] %vm243, %v687
        %711 = vst.msk [vmem:[#allocation2 + $0xa] sm:$0xff] %vm243, %v689
        %712 = vst.msk [vmem:[#allocation2 + $0x1a] sm:$0xff] %vm243, %v691
        %713 = vst.msk [vmem:[#allocation2 + $0x22] sm:$0xff] %vm243, %v693
        %714 = vst.msk [vmem:[#allocation2 + $0x32] sm:$0xff] %vm243, %v695
        %715 = vst.msk [vmem:[#allocation2 + $0x3a] sm:$0xff] %vm243, %v697
        %716 = vst.msk [vmem:[#allocation2 + $0x4a] sm:$0xff] %vm243, %v699
        %717 = vst.msk [vmem:[#allocation2 + $0x52] sm:$0xff] %vm243, %v701
        %v718 = vld [vmem:[#allocation2] sm:$0xff]
        %v719 = vld [vmem:[#allocation2 + $0x8] sm:$0xff]
        %v720 = vld [vmem:[#allocation2 + $0x18] sm:$0xff]
        %v721 = vld [vmem:[#allocation2 + $0x20] sm:$0xff]
        %v722 = vld [vmem:[#allocation2 + $0x30] sm:$0xff]
        %v723 = vld [vmem:[#allocation2 + $0x38] sm:$0xff]
        %v724 = vld [vmem:[#allocation2 + $0x48] sm:$0xff]
        %v725 = vld [vmem:[#allocation2 + $0x50] sm:$0xff]
        %v726 = vld [vmem:[#allocation2 + $0x1] sm:$0xff]
        %v727 = vld [vmem:[#allocation2 + $0x9] sm:$0xff]
        %v728 = vld [vmem:[#allocation2 + $0x19] sm:$0xff]
        %v729 = vld [vmem:[#allocation2 + $0x21] sm:$0xff]
        %v730 = vld [vmem:[#allocation2 + $0x31] sm:$0xff]
        %v731 = vld [vmem:[#allocation2 + $0x39] sm:$0xff]
        %v732 = vld [vmem:[#allocation2 + $0x49] sm:$0xff]
        %v733 = vld [vmem:[#allocation2 + $0x51] sm:$0xff]
        %v734 = vmax.f32 %v718, %v726
        %v735 = vmax.f32 %v719, %v727
        %v736 = vmax.f32 %v720, %v728
        %v737 = vmax.f32 %v721, %v729
        %v738 = vmax.f32 %v722, %v730
        %v739 = vmax.f32 %v723, %v731
        %v740 = vmax.f32 %v724, %v732
        %v741 = vmax.f32 %v725, %v733
        %v742 = vld [vmem:[#allocation2 + $0x2] sm:$0xff]
        %v743 = vld [vmem:[#allocation2 + $0xa] sm:$0xff]
        %v744 = vld [vmem:[#allocation2 + $0x1a] sm:$0xff]
        %v745 = vld [vmem:[#allocation2 + $0x22] sm:$0xff]
        %v746 = vld [vmem:[#allocation2 + $0x32] sm:$0xff]
        %v747 = vld [vmem:[#allocation2 + $0x3a] sm:$0xff]
        %v748 = vld [vmem:[#allocation2 + $0x4a] sm:$0xff]
        %v749 = vld [vmem:[#allocation2 + $0x52] sm:$0xff]
        %v750 = vld [vmem:[#allocation2 + $0x3] sm:$0xff]
        %v751 = vld [vmem:[#allocation2 + $0xb] sm:$0xff]
        %v752 = vld [vmem:[#allocation2 + $0x1b] sm:$0xff]
        %v753 = vld [vmem:[#allocation2 + $0x23] sm:$0xff]
        %v754 = vld [vmem:[#allocation2 + $0x33] sm:$0xff]
        %v755 = vld [vmem:[#allocation2 + $0x3b] sm:$0xff]
        %v756 = vld [vmem:[#allocation2 + $0x4b] sm:$0xff]
        %v757 = vld [vmem:[#allocation2 + $0x53] sm:$0xff]
        %v758 = vmax.f32 %v742, %v750
        %v759 = vmax.f32 %v743, %v751
        %v760 = vmax.f32 %v744, %v752
        %v761 = vmax.f32 %v745, %v753
        %v762 = vmax.f32 %v746, %v754
        %v763 = vmax.f32 %v747, %v755
        %v764 = vmax.f32 %v748, %v756
        %v765 = vmax.f32 %v749, %v757
        %v766 = vmax.f32 %v734, %v758
        %v767 = vmax.f32 %v735, %v759
        %v768 = vmax.f32 %v736, %v760
        %v769 = vmax.f32 %v737, %v761
        %v770 = vmax.f32 %v738, %v762
        %v771 = vmax.f32 %v739, %v763
        %v772 = vmax.f32 %v740, %v764
        %v773 = vmax.f32 %v741, %v765
        %v774 = vld [vmem:[#allocation2 + $0x4] sm:$0xff]
        %v775 = vld [vmem:[#allocation2 + $0xc] sm:$0xff]
        %v776 = vld [vmem:[#allocation2 + $0x1c] sm:$0xff]
        %v777 = vld [vmem:[#allocation2 + $0x24] sm:$0xff]
        %v778 = vld [vmem:[#allocation2 + $0x34] sm:$0xff]
        %v779 = vld [vmem:[#allocation2 + $0x3c] sm:$0xff]
        %v780 = vld [vmem:[#allocation2 + $0x4c] sm:$0xff]
        %v781 = vld [vmem:[#allocation2 + $0x54] sm:$0xff]
        %v782 = vmax.f32 %v766, %v774
        %v783 = vmax.f32 %v767, %v775
        %v784 = vmax.f32 %v768, %v776
        %v785 = vmax.f32 %v769, %v777
        %v786 = vmax.f32 %v770, %v778
        %v787 = vmax.f32 %v771, %v779
        %v788 = vmax.f32 %v772, %v780
        %v789 = vmax.f32 %v773, %v781
        %798 = vrot.lane.b32.xlu0 %v782, 127
        %v799 = vpop.permute.xlu0 %798
        %800 = vrot.lane.b32.xlu0 %v783, 127
        %v801 = vpop.permute.xlu0 %800
        %802 = vrot.lane.b32.xlu0 %v784, 127
        %v803 = vpop.permute.xlu0 %802
        %804 = vrot.lane.b32.xlu0 %v785, 127
        %v805 = vpop.permute.xlu0 %804
        %806 = vrot.lane.b32.xlu0 %v786, 127
        %v807 = vpop.permute.xlu0 %806
        %808 = vrot.lane.b32.xlu0 %v787, 127
        %v809 = vpop.permute.xlu0 %808
        %810 = vrot.lane.b32.xlu0 %v788, 127
        %v811 = vpop.permute.xlu0 %810
        %812 = vrot.lane.b32.xlu0 %v789, 127
        %v813 = vpop.permute.xlu0 %812
        %v822 = vmax.f32 %v782, %v799
        %v823 = vmax.f32 %v783, %v801
        %v824 = vmax.f32 %v784, %v803
        %v825 = vmax.f32 %v785, %v805
        %v826 = vmax.f32 %v786, %v807
        %v827 = vmax.f32 %v787, %v809
        %v828 = vmax.f32 %v788, %v811
        %v829 = vmax.f32 %v789, %v813
        %838 = vrot.lane.b32.xlu0 %v822, 126
        %v839 = vpop.permute.xlu0 %838
        %840 = vrot.lane.b32.xlu0 %v823, 126
        %v841 = vpop.permute.xlu0 %840
        %842 = vrot.lane.b32.xlu0 %v824, 126
        %v843 = vpop.permute.xlu0 %842
        %844 = vrot.lane.b32.xlu0 %v825, 126
        %v845 = vpop.permute.xlu0 %844
        %846 = vrot.lane.b32.xlu0 %v826, 126
        %v847 = vpop.permute.xlu0 %846
        %848 = vrot.lane.b32.xlu0 %v827, 126
        %v849 = vpop.permute.xlu0 %848
        %850 = vrot.lane.b32.xlu0 %v828, 126
        %v851 = vpop.permute.xlu0 %850
        %852 = vrot.lane.b32.xlu0 %v829, 126
        %v853 = vpop.permute.xlu0 %852
        %v862 = vmax.f32 %v822, %v839
        %v863 = vmax.f32 %v823, %v841
        %v864 = vmax.f32 %v824, %v843
        %v865 = vmax.f32 %v825, %v845
        %v866 = vmax.f32 %v826, %v847
        %v867 = vmax.f32 %v827, %v849
        %v868 = vmax.f32 %v828, %v851
        %v869 = vmax.f32 %v829, %v853
        %870 = vrot.lane.b32.xlu0 %v782, 124
        %v871 = vpop.permute.xlu0 %870
        %872 = vrot.lane.b32.xlu0 %v783, 124
        %v873 = vpop.permute.xlu0 %872
        %874 = vrot.lane.b32.xlu0 %v784, 124
        %v875 = vpop.permute.xlu0 %874
        %876 = vrot.lane.b32.xlu0 %v785, 124
        %v877 = vpop.permute.xlu0 %876
        %878 = vrot.lane.b32.xlu0 %v786, 124
        %v879 = vpop.permute.xlu0 %878
        %880 = vrot.lane.b32.xlu0 %v787, 124
        %v881 = vpop.permute.xlu0 %880
        %882 = vrot.lane.b32.xlu0 %v788, 124
        %v883 = vpop.permute.xlu0 %882
        %884 = vrot.lane.b32.xlu0 %v789, 124
        %v885 = vpop.permute.xlu0 %884
        %v894 = vmax.f32 %v862, %v871
        %v895 = vmax.f32 %v863, %v873
        %v896 = vmax.f32 %v864, %v875
        %v897 = vmax.f32 %v865, %v877
        %v898 = vmax.f32 %v866, %v879
        %v899 = vmax.f32 %v867, %v881
        %v900 = vmax.f32 %v868, %v883
        %v901 = vmax.f32 %v869, %v885
        %902 = vst.msk [vmem:[%s153] sm:$0xff] %vm202, %v894
        %903 = vst.msk [vmem:[%s153 + $0x8] sm:$0xff] %vm202, %v895
        %904 = vst.msk [vmem:[%s153 + $0x10] sm:$0xff] %vm202, %v896
        %905 = vst.msk [vmem:[%s153 + $0x18] sm:$0xff] %vm202, %v897
        %906 = vst.msk [vmem:[%s153 + $0x20] sm:$0xff] %vm202, %v898
        %907 = vst.msk [vmem:[%s153 + $0x28] sm:$0xff] %vm202, %v899
        %908 = vst.msk [vmem:[%s153 + $0x30] sm:$0xff] %vm202, %v900
        %909 = vst.msk [vmem:[%s153 + $0x38] sm:$0xff] %vm202, %v901
        %s910 = sand.u32 %s68, 1
        %s911 = scalar_lea.sflag [#allocation5], %s910
        %s912 = sand.u32 %s68, 1
        %s913 = smul.addr %s912, 256
        %s914 = scalar_lea.vmem [#allocation6], %s913
        // Predicated region
        $region29: #{tpu_custom_call.1} parent=23 // pred_check
          %p915 = pneg %p78
        $region30: #{tpu_custom_call.1} parent=23 // pred_check_branch
          %917 = sbr.rel (%p915) target = $region32
        $region31: #{tpu_custom_call.1} parent=23 // pred_region
          %s918 = smul.u32 4, %s23
          %s920 = ssub.s32 4096, 4096
          %921 = vsyncadd %s911, %s920
          %s922 = smul.addr %s918, 2
          %s923 = smul.addr %s22, 32
          %s924 = sadd.s32 %s922, %s923
          %s925 = smul.addr %s924, 128
          %s926 = scalar_lea.hbm %s1, %s925
          %s927 = sshll.u32 %s914, 4
          %s928 = int_to_ptr.vmem [resolvable:$true] %s927
          %933 = dma.vmem_to_hbm [thread:$0]  %s928, 4096, %s926, %s911, 128, 128, 8
        $region32: #{tpu_custom_call.1} parent=23 // pred_fallthru
          _
      $region24: #{tpu_custom_call.1} parent=5 // pred_fallthru
        _
      %p934 = scmp.le.s32.totalorder 2, %s13
      // Predicated region
      $region33: #{tpu_custom_call.1} parent=5 // pred_check
        %p935 = pneg %p934
      $region34: #{tpu_custom_call.1} parent=5 // pred_check_branch
        %937 = sbr.rel (%p935) target = $region36
      $region35: #{tpu_custom_call.1} parent=5 // pred_region
        %s938 = ssub.s32 %s13, 2
        // Predicated region
        $region37: #{tpu_custom_call.1} parent=35 // pred_check
          %p939 = pneg %p84
        $region38: #{tpu_custom_call.1} parent=35 // pred_check_branch
          %941 = sbr.rel (%p939) target = $region40
        $region39: #{tpu_custom_call.1} parent=35 // pred_region
          %s942 = sand.u32 %s69, 1
          %s943 = scalar_lea.sflag [#allocation5], %s942
          %s944 = sand.u32 %s69, 1
          %s945 = smul.addr %s944, 256
          %s946 = scalar_lea.vmem [#allocation6], %s945
          %947 = dma.done %s943, 4096
        $region40: #{tpu_custom_call.1} parent=35 // pred_fallthru
          _
      $region36: #{tpu_custom_call.1} parent=5 // pred_fallthru
        _
    $region6: #{tpu_custom_call.1} parent=1 // loop_footer
      %s17 = sadd.s32 1, %s13
    $region7: #{tpu_custom_call.1} parent=1 // loop_footer_branch
      %12 = sbr.rel target = $region3
    $region8: #{tpu_custom_call.1} parent=1 // loop_exit
      _
    %948 = vsyncpa [#allocation4], 1
    %s949 = scalar_lea.sflag [#allocation4], 1
    %950 = vsyncpa %s949, 1
    %951 = vsyncpa [#allocation5], 1
    %s952 = scalar_lea.sflag [#allocation5], 1
    %953 = vsyncpa %s952, 1

</llo_original>
